<compile_context>
chip_gen: v5e
topology: v5e:2x2
jax: 0.10.0
libtpu: 0.0.40
codegen_flags: <defaults>
</compile_context>

<pallas_src>
import math
from functools import partial

import jax
import jax.numpy as jnp
from jax import lax
from jax.experimental import pallas as pl
from jax.experimental.pallas import tpu as pltpu


def _one_sided_attn_kernel(q_ref, k_ref, wq_ref, bq_ref, wk_ref, bk_ref, o_ref,
                           *, compute_dtype, approx_recip):
    """One grid step: Bt batch elements, full (S, W) attention per batch.

    q_ref/k_ref: (Bt, S, W) in compute_dtype (pre-cast in the wrapper).
    wq_ref/wk_ref: (W, W) pre-transposed, compute_dtype (wk pre-scaled by 1/sqrt(W)).
    bq_ref/bk_ref: (1, W) float32 (bk pre-scaled by 1/sqrt(W)).
    o_ref: (Bt, S, W) output dtype.
    """
    Bt, S, W = q_ref.shape

    # ---- Projections: one tall (Bt*S, W) @ (W, W) matmul per operand --------
    # (leading-dim collapse only: no lane<->sublane relayout)
    q2 = q_ref[...].reshape(Bt * S, W)
    k2 = k_ref[...].reshape(Bt * S, W)
    qp2 = jnp.dot(q2, wq_ref[...], preferred_element_type=jnp.float32) + bq_ref[...]
    kp2 = jnp.dot(k2, wk_ref[...], preferred_element_type=jnp.float32) + bk_ref[...]
    # NOTE: the 1/sqrt(d_k) scale is already folded into wk/bk on the host.

    # Cast once so BOTH operands of the O(S^2*W) matmuls are compute_dtype
    # (f32 accumulation preserved by preferred_element_type below).
    qp = qp2.astype(compute_dtype).reshape(Bt, S, W)
    kp = kp2.astype(compute_dtype).reshape(Bt, S, W)

    # ---- Scores: batched qp @ kp^T (contract the lane dim; no transpose) ----
    scores = lax.dot_general(
        qp, kp,
        dimension_numbers=(((2,), (2,)), ((0,), (0,))),
        preferred_element_type=jnp.float32)                     # (Bt, S, S) f32

    # ---- Max-stabilized softmax; normalization deferred past the PV matmul --
    # TODO(synk): at S < 128 the exp/max/sum run at S/128 lane occupancy;
    # packing several score rows per 128-lane slab needs a repack Mosaic can't
    # lower for these shapes.
    m = jnp.max(scores, axis=-1, keepdims=True)
    e = jnp.exp(scores - m)                                     # unnormalized probs
    l = jnp.sum(e, axis=-1, keepdims=True)                      # (Bt, S, 1)

    # Attention output: value == projected query (one-sided attention).
    ctx = lax.dot_general(
        e.astype(compute_dtype), qp,
        dimension_numbers=(((2,), (1,)), ((0,), (0,))),
        preferred_element_type=jnp.float32)                     # (Bt, S, W) f32

    # Only O(Bt*S) reciprocals -> exact reciprocal is effectively free (EUP slot).
    out = ctx * pl.reciprocal(l, approx=approx_recip)
    o_ref[...] = out.astype(o_ref.dtype)


def _vmem_plan(B, S, W, compute_itemsize, out_itemsize, *,
               target_bytes=6 << 20, vmem_budget_bytes=None):
    """Pick the batch tile Bt and a VMEM limit.

    Accounts for double-buffered I/O blocks, the (constant) weight/bias blocks
    and the in-kernel f32 intermediates, budgeted against the device VMEM
    capacity (64 MiB/core on v7x). Guarantees >= 2 grid steps (prefer an even
    count) so the parallel axis shards over v7x's 2 TensorCores and the
    pipeline has something to prefetch.
    """
    per_batch = (
        2 * 2 * S * W * compute_itemsize     # q, k blocks (double-buffered)
        + 2 * S * W * out_itemsize           # out block (double-buffered)
        + 3 * S * W * 4                      # qp, kp, ctx (f32)
        + 2 * S * W * compute_itemsize       # compute-dtype copies of qp, kp
        + 2 * S * S * 4                      # scores, e (f32)
    )
    fixed = 2 * (2 * W * W * compute_itemsize + 2 * W * 4)   # weights + biases (<=2 bufs)

    if vmem_budget_bytes is None:
        try:
            vmem_budget_bytes = pltpu.get_tpu_info().vmem_capacity_bytes
        except Exception:
            vmem_budget_bytes = 64 << 20     # conservative fallback (v7x per-core VMEM)
    usable = max(per_batch, vmem_budget_bytes // 2 - fixed)   # keep ~50% headroom

    bt = max(1, min(B, min(target_bytes, usable) // per_batch))
    if B >= 2:
        bt = min(bt, B // 2)                 # at least 2 grid steps
    bt = max(bt, 1)
    while B % bt:                            # no partial blocks
        bt -= 1
    if (B // bt) % 2:                        # prefer an even step count (2 TCs)
        c = bt - 1
        while c >= 1 and (B % c or (B // c) % 2):
            c -= 1
        if c >= 1:
            bt = c

    need = fixed + bt * per_batch
    vmem_limit = int(min(vmem_budget_bytes, max(32 << 20, 2 * need)))
    return bt, vmem_limit


def one_sided_attention(query, key, wq, bq, wk, bk, *,
                        compute_dtype=jnp.bfloat16,
                        approx_reciprocal=False,
                        batch_tile=None):
    """query, key: (B, S, W). wq/wk: (W, W) torch layout (out, in). bq/bk: (W,).

    compute_dtype: MXU operand dtype (accumulation is always f32). bf16 by
    default — the MXU is bf16-native on v5e/v6e/v7x; pass jnp.float32 for
    bit-accurate math.
    """
    B, S, W = query.shape
    out_dtype = query.dtype
    c_size = jnp.dtype(compute_dtype).itemsize
    o_size = jnp.dtype(out_dtype).itemsize

    bt, vmem_limit = _vmem_plan(B, S, W, c_size, o_size)
    if batch_tile is not None:
        bt = batch_tile
    assert B % bt == 0, "batch tile must divide B"

    # Host-side glue (outside the hot loop):
    #  * transpose weights so the kernel does x @ W^T directly,
    #  * fold the 1/sqrt(d_k) softmax scale into the key projection,
    #  * pre-cast inputs/weights to the MXU operand dtype.
    inv_sqrt_w = 1.0 / math.sqrt(W)
    wq_t = jnp.asarray(wq).T.astype(compute_dtype)
    wk_t = (jnp.asarray(wk).T * inv_sqrt_w).astype(compute_dtype)
    bq2 = jnp.asarray(bq).reshape(1, W).astype(jnp.float32)
    bk2 = (jnp.asarray(bk) * inv_sqrt_w).reshape(1, W).astype(jnp.float32)
    q_in = query.astype(compute_dtype)
    k_in = key.astype(compute_dtype)

    # Grid-invariant weight/bias blocks: drop their double-buffering when they
    # are big enough to matter (VMEM headroom is scarce on v7x's 64 MiB).
    w_kwargs = {}
    if W * W * c_size >= (1 << 20):
        w_kwargs["pipeline_mode"] = pl.Buffered(1)

    # Advisory cost hint (actual element sizes, not hard-coded f32).
    flops = 4 * B * S * W * W + 4 * B * S * S * W
    bytes_accessed = (2 * B * S * W * c_size + B * S * W * o_size
                      + 2 * W * W * c_size + 2 * W * 4)
    cost = pl.CostEstimate(flops=flops, transcendentals=B * S * S + B * S,
                           bytes_accessed=bytes_accessed)

    kernel = partial(_one_sided_attn_kernel, compute_dtype=compute_dtype,
                     approx_recip=approx_reciprocal)

    return pl.pallas_call(
        kernel,
        out_shape=jax.ShapeDtypeStruct((B, S, W), out_dtype),
        grid_spec=pltpu.PrefetchScalarGridSpec(
            num_scalar_prefetch=0,
            grid=(B // bt,),
            in_specs=[
                pl.BlockSpec((bt, S, W), lambda b: (b, 0, 0)),        # query
                pl.BlockSpec((bt, S, W), lambda b: (b, 0, 0)),        # key
                pl.BlockSpec((W, W), lambda b: (0, 0), **w_kwargs),   # Wq^T
                pl.BlockSpec((1, W), lambda b: (0, 0), **w_kwargs),   # bq
                pl.BlockSpec((W, W), lambda b: (0, 0), **w_kwargs),   # Wk^T * 1/sqrt(W)
                pl.BlockSpec((1, W), lambda b: (0, 0), **w_kwargs),   # bk * 1/sqrt(W)
            ],
            out_specs=pl.BlockSpec((bt, S, W), lambda b: (b, 0, 0)),
        ),
        compiler_params=pltpu.CompilerParams(
            # Batch-tile axis is embarrassingly parallel: shards across the two
            # TensorCores on v7x; harmless on single-TC v5e/v6e.
            dimension_semantics=("parallel",),
            vmem_limit_bytes=vmem_limit,
        ),
        cost_estimate=cost,
    )(q_in, k_in, wq_t, bq2, wk_t, bk2)


def _reference(query, key, wq, bq, wk, bk):
    # Full-precision reference (forces f32 matmuls regardless of TPU defaults).
    with jax.default_matmul_precision("highest"):
        qp = query @ wq.T + bq
        kp = key @ wk.T + bk
        d_k = qp.shape[-1]
        scores = jnp.einsum("bqd,bkd->bqk", qp, kp) / math.sqrt(d_k)
        p = jax.nn.softmax(scores, axis=-1)
        return jnp.einsum("bqk,bkd->bqd", p, qp)


if __name__ == "__main__":
    # Small shapes consistent with the module: W = feature dim ("w"); h unused in forward.
    B, S, W = 2, 8, 32
    key0 = jax.random.PRNGKey(0)
    k_q, k_k, k_wq, k_bq, k_wk, k_bk = jax.random.split(key0, 6)

    query = jax.random.normal(k_q, (B, S, W), dtype=jnp.float32)
    keyx = jax.random.normal(k_k, (B, S, W), dtype=jnp.float32)

    # Deterministic "nn.Linear(w, w)" parameters (torch layout: weight (out, in), bias (out,)).
    bound = 1.0 / math.sqrt(W)
    wq = jax.random.uniform(k_wq, (W, W), minval=-bound, maxval=bound, dtype=jnp.float32)
    bq = jax.random.uniform(k_bq, (W,), minval=-bound, maxval=bound, dtype=jnp.float32)
    wk = jax.random.uniform(k_wk, (W, W), minval=-bound, maxval=bound, dtype=jnp.float32)
    bk = jax.random.uniform(k_bk, (W,), minval=-bound, maxval=bound, dtype=jnp.float32)

    ref = _reference(query, keyx, wq, bq, wk, bk)

    # Exact f32-operand path (exact reciprocal): tight tolerance.
    out_f32 = jax.block_until_ready(
        one_sided_attention(query, keyx, wq, bq, wk, bk, compute_dtype=jnp.float32))
    assert out_f32.shape == (B, S, W)
    assert jnp.allclose(out_f32, ref, atol=1e-3, rtol=1e-3), \
        f"f32 path max abs err {float(jnp.max(jnp.abs(out_f32 - ref)))}"

    # Default bf16-operand path (f32 accumulate + f32 softmax): MXU-native everywhere.
    out_bf16 = jax.block_until_ready(one_sided_attention(query, keyx, wq, bq, wk, bk))
    assert out_bf16.shape == (B, S, W)
    assert jnp.allclose(out_bf16, ref, atol=2e-2, rtol=2e-2), \
        f"bf16 path max abs err {float(jnp.max(jnp.abs(out_bf16 - ref)))}"

    print("KERNEL_OK")
</pallas_src>

<mosaic_0001>
module attributes {stable_mosaic.version = 11 : i64} {
  func.func @_one_sided_attn_kernel(%arg0: i32, %arg1: memref<1x8x32xf32, #tpu.memory_space<vmem>>, %arg2: memref<1x8x32xf32, #tpu.memory_space<vmem>>, %arg3: memref<32x32xf32, #tpu.memory_space<vmem>>, %arg4: memref<1x32xf32, #tpu.memory_space<vmem>>, %arg5: memref<32x32xf32, #tpu.memory_space<vmem>>, %arg6: memref<1x32xf32, #tpu.memory_space<vmem>>, %arg7: memref<1x8x32xf32, #tpu.memory_space<vmem>>) attributes {dimension_semantics = [#tpu.dimension_semantics<parallel>], iteration_bounds = array<i64: 2>, scalar_prefetch = 0 : i64, scratch_operands = 0 : i64, tpu.core_type = #tpu.core_type<tc>, window_params = [{transform_indices = @transform_0, window_bounds = array<i64: 1, 8, 32>}, {transform_indices = @transform_1, window_bounds = array<i64: 1, 8, 32>}, {pipeline_mode = #tpu.pipeline_mode<synchronous>, transform_indices = @transform_2, window_bounds = array<i64: 32, 32>}, {pipeline_mode = #tpu.pipeline_mode<synchronous>, transform_indices = @transform_3, window_bounds = array<i64: 1, 32>}, {pipeline_mode = #tpu.pipeline_mode<synchronous>, transform_indices = @transform_4, window_bounds = array<i64: 32, 32>}, {pipeline_mode = #tpu.pipeline_mode<synchronous>, transform_indices = @transform_5, window_bounds = array<i64: 1, 32>}, {transform_indices = @transform_6, window_bounds = array<i64: 1, 8, 32>}]} {
    %c0 = arith.constant 0 : index
    %c0_0 = arith.constant 0 : index
    %c0_1 = arith.constant 0 : index
    %0 = vector.load %arg1[%c0, %c0_0, %c0_1] : memref<1x8x32xf32, #tpu.memory_space<vmem>>, vector<1x8x32xf32>
    %1 = vector.shape_cast %0 : vector<1x8x32xf32> to vector<8x32xf32>
    %c0_2 = arith.constant 0 : index
    %c0_3 = arith.constant 0 : index
    %c0_4 = arith.constant 0 : index
    %2 = vector.load %arg2[%c0_2, %c0_3, %c0_4] : memref<1x8x32xf32, #tpu.memory_space<vmem>>, vector<1x8x32xf32>
    %3 = vector.shape_cast %2 : vector<1x8x32xf32> to vector<8x32xf32>
    %c0_5 = arith.constant 0 : index
    %c0_6 = arith.constant 0 : index
    %4 = vector.load %arg3[%c0_5, %c0_6] : memref<32x32xf32, #tpu.memory_space<vmem>>, vector<32x32xf32>
    %cst = arith.constant dense<0.000000e+00> : vector<8x32xf32>
    %5 = tpu.matmul %1, %4, %cst {dimension_numbers = #tpu.dot_dimension_numbers<[1], [0], [0], [1], [0, 0, 1, 1], [], []>} : vector<8x32xf32>, vector<32x32xf32>, vector<8x32xf32> -> vector<8x32xf32>
    %c0_7 = arith.constant 0 : index
    %c0_8 = arith.constant 0 : index
    %6 = vector.load %arg4[%c0_7, %c0_8] : memref<1x32xf32, #tpu.memory_space<vmem>>, vector<1x32xf32>
    %7 = vector.broadcast %6 : vector<1x32xf32> to vector<8x32xf32>
    %8 = arith.addf %5, %7 : vector<8x32xf32>
    %c0_9 = arith.constant 0 : index
    %c0_10 = arith.constant 0 : index
    %9 = vector.load %arg5[%c0_9, %c0_10] : memref<32x32xf32, #tpu.memory_space<vmem>>, vector<32x32xf32>
    %cst_11 = arith.constant dense<0.000000e+00> : vector<8x32xf32>
    %10 = tpu.matmul %3, %9, %cst_11 {dimension_numbers = #tpu.dot_dimension_numbers<[1], [0], [0], [1], [0, 0, 1, 1], [], []>} : vector<8x32xf32>, vector<32x32xf32>, vector<8x32xf32> -> vector<8x32xf32>
    %c0_12 = arith.constant 0 : index
    %c0_13 = arith.constant 0 : index
    %11 = vector.load %arg6[%c0_12, %c0_13] : memref<1x32xf32, #tpu.memory_space<vmem>>, vector<1x32xf32>
    %12 = vector.broadcast %11 : vector<1x32xf32> to vector<8x32xf32>
    %13 = arith.addf %10, %12 : vector<8x32xf32>
    %14 = vector.shape_cast %8 : vector<8x32xf32> to vector<1x8x32xf32>
    %15 = vector.shape_cast %13 : vector<8x32xf32> to vector<1x8x32xf32>
    %cst_14 = arith.constant dense<0.000000e+00> : vector<1x8x8xf32>
    %16 = tpu.matmul %14, %15, %cst_14 {dimension_numbers = #tpu.dot_dimension_numbers<[2], [2], [1], [1], [0, 0, 0, 1, 1, 1], [0], [0]>} : vector<1x8x32xf32>, vector<1x8x32xf32>, vector<1x8x8xf32> -> vector<1x8x8xf32>
    %cst_15 = arith.constant dense<0xFF800000> : vector<1x8xf32>
    %17 = vector.multi_reduction <maximumf>, %16, %cst_15 [2] : vector<1x8x8xf32> to vector<1x8xf32>
    %18 = vector.shape_cast %17 : vector<1x8xf32> to vector<1x8x1xf32>
    %19 = vector.broadcast %18 : vector<1x8x1xf32> to vector<1x8x8xf32>
    %20 = arith.subf %16, %19 : vector<1x8x8xf32>
    %21 = math.exp %20 : vector<1x8x8xf32>
    %cst_16 = arith.constant dense<0.000000e+00> : vector<1x8xf32>
    %22 = vector.multi_reduction <add>, %21, %cst_16 [2] : vector<1x8x8xf32> to vector<1x8xf32>
    %23 = vector.shape_cast %22 : vector<1x8xf32> to vector<1x8x1xf32>
    %cst_17 = arith.constant dense<0.000000e+00> : vector<1x8x32xf32>
    %24 = tpu.matmul %21, %14, %cst_17 {dimension_numbers = #tpu.dot_dimension_numbers<[2], [1], [1], [2], [0, 0, 0, 1, 1, 2], [0], [0]>} : vector<1x8x8xf32>, vector<1x8x32xf32>, vector<1x8x32xf32> -> vector<1x8x32xf32>
    %25 = tpu.reciprocal %23 : vector<1x8x1xf32> -> vector<1x8x1xf32>
    %26 = vector.broadcast %25 : vector<1x8x1xf32> to vector<1x8x32xf32>
    %27 = arith.mulf %24, %26 : vector<1x8x32xf32>
    %c0_18 = arith.constant 0 : index
    %c0_19 = arith.constant 0 : index
    %c0_20 = arith.constant 0 : index
    %28 = vector.load %arg7[%c0_18, %c0_19, %c0_20] : memref<1x8x32xf32, #tpu.memory_space<vmem>>, vector<1x8x32xf32>
    tpu.vector_store %arg7[%c0_18, %c0_19, %c0_20], %27 {strides = array<i32>} : memref<1x8x32xf32, #tpu.memory_space<vmem>>, vector<1x8x32xf32>,
    return
  }
  func.func @transform_0(%arg0: i32) -> (i32, i32, i32) {
    %c0_i32 = arith.constant 0 : i32
    %c0_i32_0 = arith.constant 0 : i32
    %c0_i32_1 = arith.constant 0 : i32
    return %arg0, %c0_i32, %c0_i32_0 : i32, i32, i32
  }
  func.func @transform_1(%arg0: i32) -> (i32, i32, i32) {
    %c0_i32 = arith.constant 0 : i32
    %c0_i32_0 = arith.constant 0 : i32
    %c0_i32_1 = arith.constant 0 : i32
    return %arg0, %c0_i32, %c0_i32_0 : i32, i32, i32
  }
  func.func @transform_2(%arg0: i32) -> (i32, i32) {
    %c0_i32 = arith.constant 0 : i32
    %c0_i32_0 = arith.constant 0 : i32
    %c0_i32_1 = arith.constant 0 : i32
    return %c0_i32, %c0_i32_0 : i32, i32
  }
  func.func @transform_3(%arg0: i32) -> (i32, i32) {
    %c0_i32 = arith.constant 0 : i32
    %c0_i32_0 = arith.constant 0 : i32
    %c0_i32_1 = arith.constant 0 : i32
    return %c0_i32, %c0_i32_0 : i32, i32
  }
  func.func @transform_4(%arg0: i32) -> (i32, i32) {
    %c0_i32 = arith.constant 0 : i32
    %c0_i32_0 = arith.constant 0 : i32
    %c0_i32_1 = arith.constant 0 : i32
    return %c0_i32, %c0_i32_0 : i32, i32
  }
  func.func @transform_5(%arg0: i32) -> (i32, i32) {
    %c0_i32 = arith.constant 0 : i32
    %c0_i32_0 = arith.constant 0 : i32
    %c0_i32_1 = arith.constant 0 : i32
    return %c0_i32, %c0_i32_0 : i32, i32
  }
  func.func @transform_6(%arg0: i32) -> (i32, i32, i32) {
    %c0_i32 = arith.constant 0 : i32
    %c0_i32_0 = arith.constant 0 : i32
    %c0_i32_1 = arith.constant 0 : i32
    return %arg0, %c0_i32, %c0_i32_0 : i32, i32, i32
  }
}

</mosaic_0001>

<llo_original>
// kernel: tpu_custom_call.1
$region0: #{tpu_custom_call.1}
  #allocation0 [shape = 'u32[]', space=smem, size = 0x4, offset = 0x4, fixed_abs, tag = 'smem constant byte address 0x4 - core index']
  #allocation1 [shape = 'u32[72,128]{1,0:T(1,128)}', space=vmem, size = 0x9000, scoped, tag = 'internal scratch']
  %s0 = inlined_call_operand.hbm [shape: f32[2,8,32], index: 0, kind: input, shape index: {}]
  %s1 = inlined_call_operand.hbm [shape: f32[2,8,32], index: 1, kind: input, shape index: {}]
  %s2 = inlined_call_operand.hbm [shape: f32[32,32], index: 2, kind: input, shape index: {}]
  %s3 = inlined_call_operand.vmem [shape: f32[1,32], index: 3, kind: input, shape index: {}]
  %s4 = inlined_call_operand.hbm [shape: f32[32,32], index: 4, kind: input, shape index: {}]
  %s5 = inlined_call_operand.vmem [shape: f32[1,32], index: 5, kind: input, shape index: {}]
  %s6 = inlined_call_operand.hbm [shape: f32[2,8,32], index: 6, kind: output, shape index: {}]
  %s7 = sld [smem:[#allocation0]]
  $region73: #{tpu_custom_call.1} parent=0
    _
  %s9 = ssub.s32 1, %s7
  %s10 = scalar_select 0, %s9, %s7
  $region1: #{tpu_custom_call.1} parent=0
    #allocation2 [shape = 'u8[8192]{0}', space=vmem, size = 0x2000, scoped, tag = 'input window, operand 0']
    #allocation3 [shape = 's32[2]{0}', space=sflag, size = 0x8, scoped, tag = 'scoped memory for tpu_custom_call.1']
    #allocation4 [shape = 's32[2]{0}', space=sflag, size = 0x8, scoped, tag = 'scoped memory for tpu_custom_call.1']
    #allocation5 [shape = 'u8[8192]{0}', space=vmem, size = 0x2000, scoped, tag = 'input window, operand 1']
    #allocation6 [shape = 's32[2]{0}', space=sflag, size = 0x8, scoped, tag = 'scoped memory for tpu_custom_call.1']
    #allocation7 [shape = 'u8[16384]{0}', space=vmem, size = 0x4000, scoped, tag = 'input window, operand 2, single buffered']
    #allocation8 [shape = 'u8[16384]{0}', space=vmem, size = 0x4000, scoped, tag = 'input window, operand 4, single buffered']
    #allocation9 [shape = 's32[1]{0}', space=sflag, size = 0x4, scoped, tag = 'scoped memory for tpu_custom_call.1']
    #allocation10 [shape = 'u8[8192]{0}', space=vmem, size = 0x2000, scoped, tag = 'output window, operand 0']
    %11 = vsyncpa [#allocation3], 0
    %s12 = scalar_lea.sflag [#allocation3], 1
    %13 = vsyncpa %s12, 0
    %14 = vsyncpa [#allocation6], 0
    %s15 = scalar_lea.sflag [#allocation6], 1
    %16 = vsyncpa %s15, 0
    %17 = vsyncpa [#allocation9], 0
    %18 = vsyncpa [#allocation4], 0
    %s19 = scalar_lea.sflag [#allocation4], 1
    %20 = vsyncpa %s19, 0
    loop: start=0, step=1, limit=4
    $region2: #{tpu_custom_call.1} parent=1 // loop_pre_header
      _
    $region3: #{tpu_custom_call.1} parent=1 // loop_header
      %s22 = sphi 0, %s26
      %p23 = scmp.ge.s32.totalorder %s22, 4
      %s32 = sphi 0, %s34
      %s35 = sphi 0, %s32
      %s36 = sphi 0, %s35
      %s52 = sphi 0, %s36
      %s58 = sphi 0, %s60
      %s61 = sphi 0, %s58
      %s62 = sphi 0, %s61
      %s78 = sphi 0, %s62
      %s82 = sphi 0, %s82
      %s84 = sphi 0, %s82
      %s85 = sphi 0, %s84
      %s99 = sphi 0, %s85
      %s103 = sphi 0, %s103
      %s105 = sphi 0, %s103
      %s106 = sphi 0, %s105
      %s120 = sphi 0, %s106
      %s124 = sphi 0, %s124
      %s126 = sphi 0, %s124
      %s127 = sphi 0, %s126
      %s141 = sphi 0, %s127
      %s145 = sphi 0, %s145
      %s147 = sphi 0, %s145
      %s148 = sphi 0, %s147
      %s162 = sphi 0, %s148
      %s168 = sphi 0, %s170
      %s171 = sphi 0, %s168
      %s172 = sphi 0, %s171
      %s188 = sphi 0, %s172
    $region4: #{tpu_custom_call.1} parent=1 // loop_header_branch
      %25 = sbr.rel (%p23) target = $region8
    $region5: #{tpu_custom_call.1} parent=1 // loop_body
      %s27 = ssub.s32 %s22, 1
      %s28 = ssub.s32 %s22, 2
      %s29 = sadd.s32 %s22, 1
      %s30 = ssub.s32 %s22, %s29
      %p31 = scmp.eq.s32.totalorder %s30, 0
      %s33 = sadd.s32 %s32, 1
      %s34 = scalar_select %p31, %s32, %s33
      %p37 = pneg %p31
      %p38 = scmp.eq.s32.totalorder %s22, 1
      %p39 = por %p37, %p38
      %p40 = scmp.ne.s32.totalorder %s32, %s35
      %p41 = scmp.eq.s32.totalorder %s22, 0
      %p42 = por %p40, %p41
      %p43 = scmp.ne.s32.totalorder %s32, %s35
      %p44 = scmp.eq.s32.totalorder %s27, 1
      %p45 = por %p43, %p44
      %p46 = scmp.ne.s32.totalorder %s35, %s36
      %p47 = scmp.eq.s32.totalorder %s27, 0
      %p48 = por %p46, %p47
      %p49 = scmp.ne.s32.totalorder %s35, %s36
      %p50 = scmp.eq.s32.totalorder %s28, 1
      %p51 = por %p49, %p50
      %p53 = scmp.ne.s32.totalorder %s36, %s52
      %p54 = scmp.eq.s32.totalorder %s28, 0
      %p55 = por %p53, %p54
      %s56 = ssub.s32 %s22, %s29
      %p57 = scmp.eq.s32.totalorder %s56, 0
      %s59 = sadd.s32 %s58, 1
      %s60 = scalar_select %p57, %s58, %s59
      %p63 = pneg %p57
      %p64 = scmp.eq.s32.totalorder %s22, 1
      %p65 = por %p63, %p64
      %p66 = scmp.ne.s32.totalorder %s58, %s61
      %p67 = scmp.eq.s32.totalorder %s22, 0
      %p68 = por %p66, %p67
      %p69 = scmp.ne.s32.totalorder %s58, %s61
      %p70 = scmp.eq.s32.totalorder %s27, 1
      %p71 = por %p69, %p70
      %p72 = scmp.ne.s32.totalorder %s61, %s62
      %p73 = scmp.eq.s32.totalorder %s27, 0
      %p74 = por %p72, %p73
      %p75 = scmp.ne.s32.totalorder %s61, %s62
      %p76 = scmp.eq.s32.totalorder %s28, 1
      %p77 = por %p75, %p76
      %p79 = scmp.ne.s32.totalorder %s62, %s78
      %p80 = scmp.eq.s32.totalorder %s28, 0
      %p81 = por %p79, %p80
      %s83 = sadd.s32 %s82, 1
      %p86 = scmp.eq.s32.totalorder %s22, 1
      %p87 = scmp.ne.s32.totalorder %s82, %s84
      %p88 = scmp.eq.s32.totalorder %s22, 0
      %p89 = por %p87, %p88
      %p90 = scmp.ne.s32.totalorder %s82, %s84
      %p91 = scmp.eq.s32.totalorder %s27, 1
      %p92 = por %p90, %p91
      %p93 = scmp.ne.s32.totalorder %s84, %s85
      %p94 = scmp.eq.s32.totalorder %s27, 0
      %p95 = por %p93, %p94
      %p96 = scmp.ne.s32.totalorder %s84, %s85
      %p97 = scmp.eq.s32.totalorder %s28, 1
      %p98 = por %p96, %p97
      %p100 = scmp.ne.s32.totalorder %s85, %s99
      %p101 = scmp.eq.s32.totalorder %s28, 0
      %p102 = por %p100, %p101
      %s104 = sadd.s32 %s103, 1
      %p107 = scmp.eq.s32.totalorder %s22, 1
      %p108 = scmp.ne.s32.totalorder %s103, %s105
      %p109 = scmp.eq.s32.totalorder %s22, 0
      %p110 = por %p108, %p109
      %p111 = scmp.ne.s32.totalorder %s103, %s105
      %p112 = scmp.eq.s32.totalorder %s27, 1
      %p113 = por %p111, %p112
      %p114 = scmp.ne.s32.totalorder %s105, %s106
      %p115 = scmp.eq.s32.totalorder %s27, 0
      %p116 = por %p114, %p115
      %p117 = scmp.ne.s32.totalorder %s105, %s106
      %p118 = scmp.eq.s32.totalorder %s28, 1
      %p119 = por %p117, %p118
      %p121 = scmp.ne.s32.totalorder %s106, %s120
      %p122 = scmp.eq.s32.totalorder %s28, 0
      %p123 = por %p121, %p122
      %s125 = sadd.s32 %s124, 1
      %p128 = scmp.eq.s32.totalorder %s22, 1
      %p129 = scmp.ne.s32.totalorder %s124, %s126
      %p130 = scmp.eq.s32.totalorder %s22, 0
      %p131 = por %p129, %p130
      %p132 = scmp.ne.s32.totalorder %s124, %s126
      %p133 = scmp.eq.s32.totalorder %s27, 1
      %p134 = por %p132, %p133
      %p135 = scmp.ne.s32.totalorder %s126, %s127
      %p136 = scmp.eq.s32.totalorder %s27, 0
      %p137 = por %p135, %p136
      %p138 = scmp.ne.s32.totalorder %s126, %s127
      %p139 = scmp.eq.s32.totalorder %s28, 1
      %p140 = por %p138, %p139
      %p142 = scmp.ne.s32.totalorder %s127, %s141
      %p143 = scmp.eq.s32.totalorder %s28, 0
      %p144 = por %p142, %p143
      %s146 = sadd.s32 %s145, 1
      %p149 = scmp.eq.s32.totalorder %s22, 1
      %p150 = scmp.ne.s32.totalorder %s145, %s147
      %p151 = scmp.eq.s32.totalorder %s22, 0
      %p152 = por %p150, %p151
      %p153 = scmp.ne.s32.totalorder %s145, %s147
      %p154 = scmp.eq.s32.totalorder %s27, 1
      %p155 = por %p153, %p154
      %p156 = scmp.ne.s32.totalorder %s147, %s148
      %p157 = scmp.eq.s32.totalorder %s27, 0
      %p158 = por %p156, %p157
      %p159 = scmp.ne.s32.totalorder %s147, %s148
      %p160 = scmp.eq.s32.totalorder %s28, 1
      %p161 = por %p159, %p160
      %p163 = scmp.ne.s32.totalorder %s148, %s162
      %p164 = scmp.eq.s32.totalorder %s28, 0
      %p165 = por %p163, %p164
      %s166 = ssub.s32 %s22, %s29
      %p167 = scmp.eq.s32.totalorder %s166, 0
      %s169 = sadd.s32 %s168, 1
      %s170 = scalar_select %p167, %s168, %s169
      %p173 = pneg %p167
      %p174 = scmp.eq.s32.totalorder %s22, 1
      %p175 = por %p173, %p174
      %p176 = scmp.ne.s32.totalorder %s168, %s171
      %p177 = scmp.eq.s32.totalorder %s22, 0
      %p178 = por %p176, %p177
      %p179 = scmp.ne.s32.totalorder %s168, %s171
      %p180 = scmp.eq.s32.totalorder %s27, 1
      %p181 = por %p179, %p180
      %p182 = scmp.ne.s32.totalorder %s171, %s172
      %p183 = scmp.eq.s32.totalorder %s27, 0
      %p184 = por %p182, %p183
      %p185 = scmp.ne.s32.totalorder %s171, %s172
      %p186 = scmp.eq.s32.totalorder %s28, 1
      %p187 = por %p185, %p186
      %p189 = scmp.ne.s32.totalorder %s172, %s188
      %p190 = scmp.eq.s32.totalorder %s28, 0
      %p191 = por %p189, %p190
      %p192 = scmp.le.s32.totalorder 1, %s22
      %p193 = scmp.lt.s32.totalorder %s22, 3
      %p194 = pnand %p192, %p193
      %p195 = pneg %p194
      // Predicated region
      $region9: #{tpu_custom_call.1} parent=5 // pred_check
        _
      $region10: #{tpu_custom_call.1} parent=5 // pred_check_branch
        %197 = sbr.rel (%p194) target = $region12
      $region11: #{tpu_custom_call.1} parent=5 // pred_region
        %s198 = ssub.s32 %s22, 1
        // Predicated region
        $region13: #{tpu_custom_call.1} parent=11 // pred_check
          %p199 = pneg %p95
        $region14: #{tpu_custom_call.1} parent=11 // pred_check_branch
          %201 = sbr.rel (%p199) target = $region16
        $region15: #{tpu_custom_call.1} parent=11 // pred_region
          %203 = vsyncadd [#allocation6], 0
          %s204 = sshll.u32 %s2, 4
          %s205 = int_to_ptr.hbm [resolvable:$true] %s204
          %s206 = sshll.u32 [#allocation7], 4
          %s207 = int_to_ptr.vmem [resolvable:$true] %s206
          %212 = dma.hbm_to_vmem [thread:$0]  %s205, 512, %s207, [#allocation6], 128, 128, 8
        $region16: #{tpu_custom_call.1} parent=11 // pred_fallthru
          _
        // Predicated region
        $region17: #{tpu_custom_call.1} parent=11 // pred_check
          %p213 = pneg %p116
        $region18: #{tpu_custom_call.1} parent=11 // pred_check_branch
          %215 = sbr.rel (%p213) target = $region20
        $region19: #{tpu_custom_call.1} parent=11 // pred_region
          _
        $region20: #{tpu_custom_call.1} parent=11 // pred_fallthru
          _
        // Predicated region
        $region21: #{tpu_custom_call.1} parent=11 // pred_check
          %p216 = pneg %p137
        $region22: #{tpu_custom_call.1} parent=11 // pred_check_branch
          %218 = sbr.rel (%p216) target = $region24
        $region23: #{tpu_custom_call.1} parent=11 // pred_region
          %220 = vsyncadd [#allocation9], 0
          %s221 = sshll.u32 %s4, 4
          %s222 = int_to_ptr.hbm [resolvable:$true] %s221
          %s223 = sshll.u32 [#allocation8], 4
          %s224 = int_to_ptr.vmem [resolvable:$true] %s223
          %229 = dma.hbm_to_vmem [thread:$0]  %s222, 512, %s224, [#allocation9], 128, 128, 8
        $region24: #{tpu_custom_call.1} parent=11 // pred_fallthru
          _
        // Predicated region
        $region25: #{tpu_custom_call.1} parent=11 // pred_check
          %p230 = pneg %p158
        $region26: #{tpu_custom_call.1} parent=11 // pred_check_branch
          %232 = sbr.rel (%p230) target = $region28
        $region27: #{tpu_custom_call.1} parent=11 // pred_region
          _
        $region28: #{tpu_custom_call.1} parent=11 // pred_fallthru
          _
      $region12: #{tpu_custom_call.1} parent=5 // pred_fallthru
        _
      %p233 = scmp.lt.s32.totalorder %s22, 2
      // Predicated region
      $region29: #{tpu_custom_call.1} parent=5 // pred_check
        %p234 = pneg %p233
      $region30: #{tpu_custom_call.1} parent=5 // pred_check_branch
        %236 = sbr.rel (%p234) target = $region32
      $region31: #{tpu_custom_call.1} parent=5 // pred_region
        // Predicated region
        $region33: #{tpu_custom_call.1} parent=31 // pred_check
          %p237 = pneg %p42
        $region34: #{tpu_custom_call.1} parent=31 // pred_check_branch
          %239 = sbr.rel (%p237) target = $region36
        $region35: #{tpu_custom_call.1} parent=31 // pred_region
          %s240 = sand.u32 %s32, 1
          %s241 = scalar_lea.sflag [#allocation3], %s240
          %s242 = sand.u32 %s32, 1
          %s243 = smul.addr %s242, 8
          %s244 = scalar_lea.vmem [#allocation2], %s243
          %246 = vsyncadd %s241, 0
          %s247 = smul.addr %s22, 8
          %s248 = scalar_lea.hbm %s0, %s247
          %s250 = sshll.u32 %s248, 4
          %s251 = int_to_ptr.hbm [resolvable:$true] %s250
          %s252 = sshll.u32 %s244, 4
          %s253 = int_to_ptr.vmem [resolvable:$true] %s252
          %255 = dma.hbm_to_vmem [thread:$0]  %s251, 128, %s253, %s241
        $region36: #{tpu_custom_call.1} parent=31 // pred_fallthru
          _
        // Predicated region
        $region37: #{tpu_custom_call.1} parent=31 // pred_check
          %p256 = pneg %p68
        $region38: #{tpu_custom_call.1} parent=31 // pred_check_branch
          %258 = sbr.rel (%p256) target = $region40
        $region39: #{tpu_custom_call.1} parent=31 // pred_region
          %s259 = sand.u32 %s22, 1
          %s260 = scalar_lea.sflag [#allocation6], %s259
          %s261 = sand.u32 %s58, 1
          %s262 = smul.addr %s261, 8
          %s263 = scalar_lea.vmem [#allocation5], %s262
          %265 = vsyncadd %s260, 0
          %s266 = smul.addr %s22, 8
          %s267 = scalar_lea.hbm %s1, %s266
          %s269 = sshll.u32 %s267, 4
          %s270 = int_to_ptr.hbm [resolvable:$true] %s269
          %s271 = sshll.u32 %s263, 4
          %s272 = int_to_ptr.vmem [resolvable:$true] %s271
          %274 = dma.hbm_to_vmem [thread:$0]  %s270, 128, %s272, %s260
        $region40: #{tpu_custom_call.1} parent=31 // pred_fallthru
          _
      $region32: #{tpu_custom_call.1} parent=5 // pred_fallthru
        _
      %p275 = scmp.le.s32.totalorder 1, %s22
      %p276 = scmp.lt.s32.totalorder %s22, 3
      %p277 = pnand %p275, %p276
      %p278 = pneg %p277
      // Predicated region
      $region41: #{tpu_custom_call.1} parent=5 // pred_check
        _
      $region42: #{tpu_custom_call.1} parent=5 // pred_check_branch
        %280 = sbr.rel (%p277) target = $region44
      $region43: #{tpu_custom_call.1} parent=5 // pred_region
        %s281 = ssub.s32 %s22, 1
        %s282 = sand.u32 %s35, 1
        %s283 = scalar_lea.sflag [#allocation3], %s282
        %s284 = sand.u32 %s35, 1
        %s285 = smul.addr %s284, 8
        %s286 = scalar_lea.vmem [#allocation2], %s285
        // Predicated region
        $region45: #{tpu_custom_call.1} parent=43 // pred_check
          %p287 = pneg %p48
        $region46: #{tpu_custom_call.1} parent=43 // pred_check_branch
          %289 = sbr.rel (%p287) target = $region48
        $region47: #{tpu_custom_call.1} parent=43 // pred_region
          %291 = dma.done %s283, 128
        $region48: #{tpu_custom_call.1} parent=43 // pred_fallthru
          _
        %s292 = sand.u32 %s27, 1
        %s293 = scalar_lea.sflag [#allocation6], %s292
        %s294 = sand.u32 %s61, 1
        %s295 = smul.addr %s294, 8
        %s296 = scalar_lea.vmem [#allocation5], %s295
        // Predicated region
        $region49: #{tpu_custom_call.1} parent=43 // pred_check
          %p297 = pneg %p74
        $region50: #{tpu_custom_call.1} parent=43 // pred_check_branch
          %299 = sbr.rel (%p297) target = $region52
        $region51: #{tpu_custom_call.1} parent=43 // pred_region
          %301 = dma.done %s293, 128
        $region52: #{tpu_custom_call.1} parent=43 // pred_fallthru
          _
        // Predicated region
        $region53: #{tpu_custom_call.1} parent=43 // pred_check
          %p302 = pneg %p95
        $region54: #{tpu_custom_call.1} parent=43 // pred_check_branch
          %304 = sbr.rel (%p302) target = $region56
        $region55: #{tpu_custom_call.1} parent=43 // pred_region
          %306 = dma.done [#allocation6], 512
        $region56: #{tpu_custom_call.1} parent=43 // pred_fallthru
          _
        // Predicated region
        $region57: #{tpu_custom_call.1} parent=43 // pred_check
          %p307 = pneg %p137
        $region58: #{tpu_custom_call.1} parent=43 // pred_check_branch
          %309 = sbr.rel (%p307) target = $region60
        $region59: #{tpu_custom_call.1} parent=43 // pred_region
          %311 = dma.done [#allocation9], 512
        $region60: #{tpu_custom_call.1} parent=43 // pred_fallthru
          _
        %s312 = sand.u32 %s35, 1
        %s313 = scalar_lea.sflag [#allocation3], %s312
        %s314 = sand.u32 %s35, 1
        %s315 = smul.addr %s314, 8
        %s316 = scalar_lea.vmem [#allocation2], %s315
        %p317 = pneg %p48
        %p318 = pneg %p45
        %s319 = sand.u32 %s27, 1
        %s320 = scalar_lea.sflag [#allocation6], %s319
        %s321 = sand.u32 %s61, 1
        %s322 = smul.addr %s321, 8
        %s323 = scalar_lea.vmem [#allocation5], %s322
        %p324 = pneg %p74
        %p325 = pneg %p71
        %p326 = pneg %p95
        %p327 = pneg %p92
        %p328 = pneg %p116
        %p329 = pneg %p113
        %p330 = pneg %p137
        %p331 = pneg %p134
        %p332 = pneg %p158
        %p333 = pneg %p155
        %p334 = pneg %p184
        %p335 = pneg %p181
        %s336 = sand.u32 %s171, 1
        %s337 = scalar_lea.sflag [#allocation4], %s336
        %s338 = sand.u32 %s171, 1
        %s339 = smul.addr %s338, 8
        %s340 = scalar_lea.vmem [#allocation10], %s339
        %v341 = vld [vmem:[%s286] sm:$0xff]
        %v342 = vld [vmem:[%s296] sm:$0xff]
        %v343 = vld [vmem:[#allocation7] sm:$0xff]
        %v344 = vld [vmem:[#allocation7 + $0x8] sm:$0xff]
        %v345 = vld [vmem:[#allocation7 + $0x10] sm:$0xff]
        %v346 = vld [vmem:[#allocation7 + $0x18] sm:$0xff]
        %v347 = vld [vmem:[%s3] sm:$0x1]
        %v349 = vperm.slane %v347, 0
        %vm351 = vcmask 261120
        %v353 = vsel %vm351, %v341, 0
        %355 = vmatpush.msra.mxu0 0.0
        %356 = vmatpush.msra.mxu0 0.0
        %357 = vmatpush.msra.mxu0 0.0
        %358 = vmatpush.msra.mxu0 0.0
        %359 = vmatpush.msra.mxu0 0.0
        %360 = vmatpush.msra.mxu0 0.0
        %361 = vmatpush.msra.mxu0 0.0
        %362 = vmatpush.msra.mxu0 0.0
        %363 = vmatpush.msra.mxu0 0.0
        %364 = vmatpush.msra.mxu0 0.0
        %365 = vmatpush.msra.mxu0 0.0
        %366 = vmatpush.msra.mxu0 0.0
        %367 = vmatpush.msra.mxu0 %v346
        %368 = vmatpush.msra.mxu0 %v345
        %369 = vmatpush.msra.mxu0 %v344
        %370 = vmatpush.msra.mxu0 %v343
        %371 = vmatmul.f32.gmra.mxu0 %v353
        %v372 = vpop.f32.mrf.mxu0
        %v373 = vadd.f32 %v349, %v372
        %374 = vdwg.mxu0
        %v375 = vld [vmem:[#allocation8] sm:$0xff]
        %v376 = vld [vmem:[#allocation8 + $0x8] sm:$0xff]
        %v377 = vld [vmem:[#allocation8 + $0x10] sm:$0xff]
        %v378 = vld [vmem:[#allocation8 + $0x18] sm:$0xff]
        %v379 = vld [vmem:[%s5] sm:$0x1]
        %v381 = vperm.slane %v379, 0
        %v384 = vsel %vm351, %v342, 0
        %386 = vmatpush.msra.mxu0 0.0
        %387 = vmatpush.msra.mxu0 0.0
        %388 = vmatpush.msra.mxu0 0.0
        %389 = vmatpush.msra.mxu0 0.0
        %390 = vmatpush.msra.mxu0 0.0
        %391 = vmatpush.msra.mxu0 0.0
        %392 = vmatpush.msra.mxu0 0.0
        %393 = vmatpush.msra.mxu0 0.0
        %394 = vmatpush.msra.mxu0 0.0
        %395 = vmatpush.msra.mxu0 0.0
        %396 = vmatpush.msra.mxu0 0.0
        %397 = vmatpush.msra.mxu0 0.0
        %398 = vmatpush.msra.mxu0 %v378
        %399 = vmatpush.msra.mxu0 %v377
        %400 = vmatpush.msra.mxu0 %v376
        %401 = vmatpush.msra.mxu0 %v375
        %402 = vmatmul.f32.gmra.mxu0 %v384
        %v403 = vpop.f32.mrf.mxu0
        %v404 = vadd.f32 %v381, %v403
        %405 = vdwg.mxu0
        %v407 = vsel %vm351, %v373, 0
        %v410 = vsel %vm351, %v404, 0
        %412 = vmatpush.xpose.msra.mxu0 0.0
        %413 = vmatpush.xpose.msra.mxu0 0.0
        %414 = vmatpush.xpose.msra.mxu0 0.0
        %415 = vmatpush.xpose.msra.mxu0 0.0
        %416 = vmatpush.xpose.msra.mxu0 0.0
        %417 = vmatpush.xpose.msra.mxu0 0.0
        %418 = vmatpush.xpose.msra.mxu0 0.0
        %419 = vmatpush.xpose.msra.mxu0 0.0
        %420 = vmatpush.xpose.msra.mxu0 0.0
        %421 = vmatpush.xpose.msra.mxu0 0.0
        %422 = vmatpush.xpose.msra.mxu0 0.0
        %423 = vmatpush.xpose.msra.mxu0 0.0
        %424 = vmatpush.xpose.msra.mxu0 0.0
        %425 = vmatpush.xpose.msra.mxu0 0.0
        %426 = vmatpush.xpose.msra.mxu0 0.0
        %427 = vmatpush.xpose.msra.mxu0 %v410
        %428 = vmatmul.f32.gmra.mxu0 %v407
        %v429 = vpop.f32.mrf.mxu0
        %v430 = vadd.f32 0.0, %v429
        %431 = vdwg.mxu0
        %vm432 = vcmask 64512
        %v433 = vsel %vm432, %v430, -inf
        %434 = vmax.xlane.f32.xlu0 %v433
        %v435 = vpop.xlane.xlu0 %434
        %v436 = vsub.f32 %v430, %v435
        %v437 = vmul.f32 %v436, 1.442695
        %v438 = vpow.pop %v437
        %v439 = vsel %vm432, %v438, 0.0
        %440 = vadd.xlane.f32.xlu0 %v439
        %v441 = vpop.xlane.xlu0 %440
        %v443 = vsel %vm432, %v438, 0
        %445 = vmatpush.msra.mxu0 0.0
        %446 = vmatpush.msra.mxu0 0.0
        %447 = vmatpush.msra.mxu0 0.0
        %448 = vmatpush.msra.mxu0 0.0
        %449 = vmatpush.msra.mxu0 0.0
        %450 = vmatpush.msra.mxu0 0.0
        %451 = vmatpush.msra.mxu0 0.0
        %452 = vmatpush.msra.mxu0 0.0
        %453 = vmatpush.msra.mxu0 0.0
        %454 = vmatpush.msra.mxu0 0.0
        %455 = vmatpush.msra.mxu0 0.0
        %456 = vmatpush.msra.mxu0 0.0
        %457 = vmatpush.msra.mxu0 0.0
        %458 = vmatpush.msra.mxu0 0.0
        %459 = vmatpush.msra.mxu0 0.0
        %460 = vmatpush.msra.mxu0 %v373
        %461 = vmatmul.f32.gmra.mxu0 %v443
        %v462 = vpop.f32.mrf.mxu0
        %v463 = vadd.f32 0.0, %v462
        %464 = vdwg.mxu0
        %v465 = vrcp.pop %v441
        %v466 = vmul.f32 %v441, %v465
        %v467 = vsub.f32 1.0, %v466
        %v468 = vmul.f32 %v465, %v467
        %v469 = vadd.f32 %v465, %v468
        %vm470 = vweird.f32 %v441
        %vm471 = vweird.f32 %v465
        %vm472 = vmor %vm470, %vm471
        %v473 = vsel %vm472, %v465, %v469
        %v474 = vand.u32 2147483647, %v441
        %vm475 = vcmp.eq.f32.partialorder %v474, 8.507059e+37
        %v476 = vand.u32 %v441, 2147483648
        %v477 = vor.u32 1.1754944e-38, %v476
        %v478 = vsel %vm475, %v477, %v473
        %v479 = vmul.f32 %v463, %v478
        %480 = vst.msk [vmem:[%s340] sm:$0xff] %vm351, %v479
        %s481 = sand.u32 %s171, 1
        %s482 = scalar_lea.sflag [#allocation4], %s481
        %s483 = sand.u32 %s171, 1
        %s484 = smul.addr %s483, 8
        %s485 = scalar_lea.vmem [#allocation10], %s484
        // Predicated region
        $region61: #{tpu_custom_call.1} parent=43 // pred_check
          %p486 = pneg %p181
        $region62: #{tpu_custom_call.1} parent=43 // pred_check_branch
          %488 = sbr.rel (%p486) target = $region64
        $region63: #{tpu_custom_call.1} parent=43 // pred_region
          %490 = vsyncadd %s482, 0
          %s491 = smul.addr %s27, 8
          %s492 = scalar_lea.hbm %s6, %s491
          %s494 = sshll.u32 %s485, 4
          %s495 = int_to_ptr.vmem [resolvable:$true] %s494
          %s496 = sshll.u32 %s492, 4
          %s497 = int_to_ptr.hbm [resolvable:$true] %s496
          %499 = dma.vmem_to_hbm [thread:$0]  %s495, 128, %s497, %s482
        $region64: #{tpu_custom_call.1} parent=43 // pred_fallthru
          _
      $region44: #{tpu_custom_call.1} parent=5 // pred_fallthru
        _
      %p500 = scmp.le.s32.totalorder 2, %s22
      // Predicated region
      $region65: #{tpu_custom_call.1} parent=5 // pred_check
        %p501 = pneg %p500
      $region66: #{tpu_custom_call.1} parent=5 // pred_check_branch
        %503 = sbr.rel (%p501) target = $region68
      $region67: #{tpu_custom_call.1} parent=5 // pred_region
        %s504 = ssub.s32 %s22, 2
        // Predicated region
        $region69: #{tpu_custom_call.1} parent=67 // pred_check
          %p505 = pneg %p187
        $region70: #{tpu_custom_call.1} parent=67 // pred_check_branch
          %507 = sbr.rel (%p505) target = $region72
        $region71: #{tpu_custom_call.1} parent=67 // pred_region
          %s508 = sand.u32 %s172, 1
          %s509 = scalar_lea.sflag [#allocation4], %s508
          %s510 = sand.u32 %s172, 1
          %s511 = smul.addr %s510, 8
          %s512 = scalar_lea.vmem [#allocation10], %s511
          %514 = dma.done %s509, 128
        $region72: #{tpu_custom_call.1} parent=67 // pred_fallthru
          _
      $region68: #{tpu_custom_call.1} parent=5 // pred_fallthru
        _
    $region6: #{tpu_custom_call.1} parent=1 // loop_footer
      %s26 = sadd.s32 1, %s22
    $region7: #{tpu_custom_call.1} parent=1 // loop_footer_branch
      %21 = sbr.rel target = $region3
    $region8: #{tpu_custom_call.1} parent=1 // loop_exit
      _
    %515 = vsyncpa [#allocation3], 1
    %s516 = scalar_lea.sflag [#allocation3], 1
    %517 = vsyncpa %s516, 1
    %518 = vsyncpa [#allocation6], 1
    %s519 = scalar_lea.sflag [#allocation6], 1
    %520 = vsyncpa %s519, 1
    %521 = vsyncpa [#allocation9], 1
    %522 = vsyncpa [#allocation4], 1
    %s523 = scalar_lea.sflag [#allocation4], 1
    %524 = vsyncpa %s523, 1

</llo_original>
